<compile_context>
chip_gen: v5e
topology: v5e:2x2
jax: 0.10.0
libtpu: 0.0.40
codegen_flags: <defaults>
</compile_context>

<pallas_src>
import functools

import jax
import jax.numpy as jnp
from jax import lax
from jax.experimental import pallas as pl
from jax.experimental.pallas import tpu as pltpu


def _round_up(x, m):
    return (x + m - 1) // m * m


# --------------------------------------------------------------------------- #
# Fused router + all-experts kernel (one grid step per token tile)
# --------------------------------------------------------------------------- #
def _moe_kernel(x_ref, wA_ref, bA_ref, noise_ref, w2s_ref, b2s_ref, eexp_ref,
                out_ref, probs_ref, idx_ref, *, top_k, n_experts, e_pad, idx_pad):
    x = x_ref[...]

    # One fused MXU matmul: lanes [0,E_pad) router logits, [E_pad,2*E_pad) noise
    # logits, [2*E_pad, ...) all experts' first-layer activations.  bf16 x bf16
    # with f32 accumulation.
    z = jnp.dot(x, wA_ref[...], preferred_element_type=jnp.float32) + bA_ref[...]
    logits = z[:, :e_pad]
    noise_logits = z[:, e_pad:2 * e_pad]
    h = jnp.maximum(z[:, 2 * e_pad:], 0.0)                    # ReLU, (tm, E*H) f32

    # Numerically stable softplus (avoids relying on log1p lowering).
    sp = jnp.maximum(noise_logits, 0.0) + jnp.log(1.0 + jnp.exp(-jnp.abs(noise_logits)))
    noisy = logits + noise_ref[...].astype(jnp.float32) * sp

    n = noisy.shape[0]
    col = lax.broadcasted_iota(jnp.int32, (n, e_pad), 1)
    neg_inf = float("-inf")

    # Exact iterative top-k: per k, one max reduce + one min-index reduce for a
    # deterministic lowest-index tie-break.  Padding lanes can never win.
    work = jnp.where(col < n_experts, noisy, neg_inf)
    selected = col < 0                                        # all-False bool mask
    kcol = lax.broadcasted_iota(jnp.int32, (n, idx_pad), 1)
    idx_acc = jnp.zeros_like(kcol)
    for k in range(top_k):                                    # static unroll
        m = jnp.max(work, axis=-1, keepdims=True)
        is_max = work == m
        idx = jnp.min(jnp.where(is_max, col, e_pad), axis=-1, keepdims=True)
        hit = col == idx
        selected = jnp.logical_or(selected, hit)
        work = jnp.where(hit, neg_inf, work)
        idx_acc = jnp.where(kcol == k, idx, idx_acc)          # write lane k
    idx_ref[...] = idx_acc.astype(idx_ref.dtype)

    # Sparse softmax over the selected experts (exact divide, per review).
    masked = jnp.where(selected, noisy, neg_inf)
    mx = jnp.max(masked, axis=-1, keepdims=True)
    p = jnp.exp(masked - mx)                                  # exp(-inf) -> 0
    denom = jnp.sum(p, axis=-1, keepdims=True)
    probs = p / denom
    probs_ref[...] = probs

    # Gate expansion via a 0/1 matrix (exact): gexp[:, e*H+j] = probs[:, e].
    gexp = jnp.dot(probs, eexp_ref[...], preferred_element_type=jnp.float32)
    gated = (h * gexp).astype(w2s_ref.dtype)
    y = jnp.dot(gated, w2s_ref[...], preferred_element_type=jnp.float32)
    y = y + jnp.dot(probs, b2s_ref[...], preferred_element_type=jnp.float32)
    out_ref[...] = y.astype(out_ref.dtype)


# --------------------------------------------------------------------------- #
# Wrapper
# --------------------------------------------------------------------------- #
def _cv_squared(x, eps=1e-10):
    """Squared coefficient of variation (torch .var() default => ddof=1)."""
    if x.shape[0] == 1:
        return jnp.zeros((), dtype=jnp.float32)
    x = x.astype(jnp.float32)
    return jnp.var(x, ddof=1) / (jnp.mean(x) ** 2 + eps)


def moe_forward(x_btd, params, noise_key, *, top_k, loss_coeff=0.01, tm=512):
    """Forward of the reference MoE module.

    Returns (output (B,T,D), aux_loss, gating (B,T,E) f32, indices (B,T,top_k));
    the first two match the PyTorch module's return values.
    """
    b, t, d = x_btd.shape
    e = params["w_route"].shape[-1]
    hid = params["w1"].shape[-1]
    assert top_k <= e
    n_tok = b * t

    # Large token tile amortizes grid-step overhead and raises arithmetic intensity
    # (review: tm=512 on v5e/v6e).  Clamp to the token count, multiple of 32 so the
    # int8 index slab keeps native (32,128) tiling.  On v7x prefer tm<=256 so the
    # "parallel" token axis has >=2 tiles for megacore sharding.
    tm = max(32, _round_up(min(tm, n_tok), 32))
    n_pad = _round_up(n_tok, tm)

    e_pad = max(128, _round_up(e, 128))
    eh = e * hid
    width = 2 * e_pad + eh
    idx_pad = 128
    idx_dtype = jnp.int8 if e <= 127 else jnp.int32

    x = x_btd.reshape(n_tok, d)
    if n_pad != n_tok:
        x = jnp.pad(x, ((0, n_pad - n_tok), (0, 0)))          # padded rows sliced off

    wdt = x.dtype
    f32 = jnp.float32

    # ---- one-time weight prep (a real model would store these pre-fused) ----
    wA = jnp.zeros((d, width), dtype=wdt)
    wA = wA.at[:, :e].set(params["w_route"].astype(wdt))
    wA = wA.at[:, e_pad:e_pad + e].set(params["w_noise"].astype(wdt))
    wA = wA.at[:, 2 * e_pad:].set(
        jnp.transpose(params["w1"], (1, 0, 2)).reshape(d, eh).astype(wdt))

    bA = jnp.zeros((1, width), dtype=f32)
    bA = bA.at[:, :e].set(params["b_route"].astype(f32))
    bA = bA.at[:, e_pad:e_pad + e].set(params["b_noise"].astype(f32))
    bA = bA.at[:, 2 * e_pad:].set(params["b1"].reshape(1, eh).astype(f32))

    w2s = params["w2"].reshape(eh, d).astype(wdt)              # [W2_0; ..; W2_{E-1}]
    b2s = jnp.zeros((e_pad, d), dtype=f32).at[:e].set(params["b2"].astype(f32))

    # 0/1 gate-expansion matrix: eexp[e, e*hid + j] = 1.
    eexp = (jnp.arange(e_pad)[:, None] == (jnp.arange(eh)[None, :] // hid)).astype(f32)

    # torch.randn_like equivalent; bf16 halves the dominant router HBM stream.
    noise = jax.random.normal(noise_key, (n_pad, e_pad), dtype=jnp.bfloat16)

    kernel = functools.partial(_moe_kernel, top_k=top_k, n_experts=e,
                               e_pad=e_pad, idx_pad=idx_pad)
    out_pad, probs_pad, idx_slab = pl.pallas_call(
        kernel,
        out_shape=(
            jax.ShapeDtypeStruct((n_pad, d), x.dtype),
            jax.ShapeDtypeStruct((n_pad, e_pad), f32),
            jax.ShapeDtypeStruct((n_pad, idx_pad), idx_dtype),
        ),
        grid_spec=pltpu.PrefetchScalarGridSpec(
            num_scalar_prefetch=0,
            grid=(n_pad // tm,),
            in_specs=[
                pl.BlockSpec((tm, d), lambda i: (i, 0)),        # x tile
                pl.BlockSpec((d, width), lambda i: (0, 0)),     # fused router+W1 (resident)
                pl.BlockSpec((1, width), lambda i: (0, 0)),     # fused biases (resident)
                pl.BlockSpec((tm, e_pad), lambda i: (i, 0)),    # noise tile
                pl.BlockSpec((eh, d), lambda i: (0, 0)),        # stacked W2 (resident)
                pl.BlockSpec((e_pad, d), lambda i: (0, 0)),     # stacked b2 (resident)
                pl.BlockSpec((e_pad, eh), lambda i: (0, 0)),    # gate expansion (resident)
            ],
            out_specs=(
                pl.BlockSpec((tm, d), lambda i: (i, 0)),        # mixed expert output
                pl.BlockSpec((tm, e_pad), lambda i: (i, 0)),    # gating probs (lane-dense)
                pl.BlockSpec((tm, idx_pad), lambda i: (i, 0)),  # top-k indices (int8 slab)
            ),
        ),
        compiler_params=pltpu.CompilerParams(
            dimension_semantics=("parallel",),
            # <=48 MiB is safe on v7x (64 MiB physical); raise toward 64-96 MiB on
            # v5e/v6e for large shapes.
            vmem_limit_bytes=48 * 1024 * 1024,
        ),
    )(x, wA, bA, noise, w2s, b2s, eexp)

    gating = probs_pad[:n_tok, :e].reshape(b, t, e)
    indices = idx_slab[:n_tok, :top_k].astype(jnp.int32).reshape(b, t, top_k)
    out = out_pad[:n_tok].reshape(b, t, d)

    importance = gating.sum(axis=0)            # torch: gating_output.sum(0) -> (T, E)
    aux_loss = loss_coeff * _cv_squared(importance)
    return out, aux_loss, gating, indices


if __name__ == "__main__":
    batch, seq, n_embed = 2, 8, 32
    num_experts, top_k = 8, 2
    hidden = 2 * n_embed

    key = jax.random.PRNGKey(0)
    keys = jax.random.split(key, 10)

    dt = jnp.bfloat16  # activations/weights in bf16; MXU accumulates in f32
    x = jax.random.normal(keys[0], (batch, seq, n_embed), dtype=dt)

    def uni(k, shape, bound):
        return jax.random.uniform(k, shape, minval=-bound, maxval=bound,
                                  dtype=jnp.float32)

    b_in = 1.0 / (n_embed ** 0.5)
    b_h = 1.0 / (hidden ** 0.5)
    params = {
        "w_route": uni(keys[1], (n_embed, num_experts), b_in).astype(dt),
        "b_route": uni(keys[2], (num_experts,), b_in),
        "w_noise": uni(keys[3], (n_embed, num_experts), b_in).astype(dt),
        "b_noise": uni(keys[4], (num_experts,), b_in),
        "w1": uni(keys[5], (num_experts, n_embed, hidden), b_in).astype(dt),
        "b1": uni(keys[6], (num_experts, hidden), b_in),
        "w2": uni(keys[7], (num_experts, hidden, n_embed), b_h).astype(dt),
        "b2": uni(keys[8], (num_experts, n_embed), b_h),
    }

    out, aux, gating, indices = moe_forward(x, params, keys[9], top_k=top_k)
    jax.block_until_ready((out, aux, gating, indices))

    assert out.shape == (batch, seq, n_embed)
    assert gating.shape == (batch, seq, num_experts)
    assert indices.shape == (batch, seq, top_k)

    row_sums = jnp.sum(gating, axis=-1)
    nnz = jnp.sum(gating > 0, axis=-1)
    assert bool(jnp.allclose(row_sums, 1.0, atol=2e-3))          # exact softmax divide
    assert bool(jnp.all(nnz == top_k))
    assert bool(jnp.all((indices >= 0) & (indices < num_experts)))
    assert bool(jnp.all(jnp.isfinite(out.astype(jnp.float32))))
    assert bool(jnp.isfinite(aux))

    print("KERNEL_OK")
</pallas_src>

<mosaic_0001>
module attributes {stable_mosaic.version = 11 : i64} {
  func.func @_moe_kernel(%arg0: i32, %arg1: memref<32x32xbf16, #tpu.memory_space<vmem>>, %arg2: memref<32x768xbf16, #tpu.memory_space<vmem>>, %arg3: memref<1x768xf32, #tpu.memory_space<vmem>>, %arg4: memref<32x128xbf16, #tpu.memory_space<vmem>>, %arg5: memref<512x32xbf16, #tpu.memory_space<vmem>>, %arg6: memref<128x32xf32, #tpu.memory_space<vmem>>, %arg7: memref<128x512xf32, #tpu.memory_space<vmem>>, %arg8: memref<32x32xbf16, #tpu.memory_space<vmem>>, %arg9: memref<32x128xf32, #tpu.memory_space<vmem>>, %arg10: memref<32x128xi8, #tpu.memory_space<vmem>>) attributes {dimension_semantics = [#tpu.dimension_semantics<parallel>], iteration_bounds = array<i64: 1>, scalar_prefetch = 0 : i64, scratch_operands = 0 : i64, tpu.core_type = #tpu.core_type<tc>, window_params = [{transform_indices = @transform_0, window_bounds = array<i64: 32, 32>}, {pipeline_mode = #tpu.pipeline_mode<synchronous>, transform_indices = @transform_1, window_bounds = array<i64: 32, 768>}, {pipeline_mode = #tpu.pipeline_mode<synchronous>, transform_indices = @transform_2, window_bounds = array<i64: 1, 768>}, {transform_indices = @transform_3, window_bounds = array<i64: 32, 128>}, {pipeline_mode = #tpu.pipeline_mode<synchronous>, transform_indices = @transform_4, window_bounds = array<i64: 512, 32>}, {pipeline_mode = #tpu.pipeline_mode<synchronous>, transform_indices = @transform_5, window_bounds = array<i64: 128, 32>}, {pipeline_mode = #tpu.pipeline_mode<synchronous>, transform_indices = @transform_6, window_bounds = array<i64: 128, 512>}, {transform_indices = @transform_7, window_bounds = array<i64: 32, 32>}, {transform_indices = @transform_8, window_bounds = array<i64: 32, 128>}, {transform_indices = @transform_9, window_bounds = array<i64: 32, 128>}]} {
    %c0 = arith.constant 0 : index
    %c0_0 = arith.constant 0 : index
    %0 = vector.load %arg1[%c0, %c0_0] : memref<32x32xbf16, #tpu.memory_space<vmem>>, vector<32x32xbf16>
    %c0_1 = arith.constant 0 : index
    %c0_2 = arith.constant 0 : index
    %1 = vector.load %arg2[%c0_1, %c0_2] : memref<32x768xbf16, #tpu.memory_space<vmem>>, vector<32x768xbf16>
    %cst = arith.constant dense<0.000000e+00> : vector<32x768xf32>
    %2 = tpu.matmul %0, %1, %cst {dimension_numbers = #tpu.dot_dimension_numbers<[1], [0], [0], [1], [0, 0, 1, 1], [], []>} : vector<32x32xbf16>, vector<32x768xbf16>, vector<32x768xf32> -> vector<32x768xf32>
    %c0_3 = arith.constant 0 : index
    %c0_4 = arith.constant 0 : index
    %3 = vector.load %arg3[%c0_3, %c0_4] : memref<1x768xf32, #tpu.memory_space<vmem>>, vector<1x768xf32>
    %4 = vector.broadcast %3 : vector<1x768xf32> to vector<32x768xf32>
    %5 = arith.addf %2, %4 : vector<32x768xf32>
    %6 = vector.extract_strided_slice %5 {offsets = [0, 0], sizes = [32, 128], strides = [1, 1]} : vector<32x768xf32> to vector<32x128xf32>
    %7 = vector.extract_strided_slice %5 {offsets = [0, 128], sizes = [32, 128], strides = [1, 1]} : vector<32x768xf32> to vector<32x128xf32>
    %8 = vector.extract_strided_slice %5 {offsets = [0, 256], sizes = [32, 512], strides = [1, 1]} : vector<32x768xf32> to vector<32x512xf32>
    %cst_5 = arith.constant 0.000000e+00 : f32
    %9 = vector.broadcast %cst_5 : f32 to vector<32x512xf32>
    %10 = arith.maximumf %8, %9 : vector<32x512xf32>
    %cst_6 = arith.constant 0.000000e+00 : f32
    %11 = vector.broadcast %cst_6 : f32 to vector<32x128xf32>
    %12 = arith.maximumf %7, %11 : vector<32x128xf32>
    %13 = math.absf %7 : vector<32x128xf32>
    %cst_7 = arith.constant 0.000000e+00 : f32
    %14 = vector.broadcast %cst_7 : f32 to vector<32x128xf32>
    %15 = arith.subf %14, %13 : vector<32x128xf32>
    %16 = math.exp %15 : vector<32x128xf32>
    %cst_8 = arith.constant 1.000000e+00 : f32
    %17 = vector.broadcast %cst_8 : f32 to vector<32x128xf32>
    %18 = arith.addf %17, %16 : vector<32x128xf32>
    %19 = math.log %18 : vector<32x128xf32>
    %20 = arith.addf %12, %19 : vector<32x128xf32>
    %c0_9 = arith.constant 0 : index
    %c0_10 = arith.constant 0 : index
    %21 = vector.load %arg4[%c0_9, %c0_10] : memref<32x128xbf16, #tpu.memory_space<vmem>>, vector<32x128xbf16>
    %22 = arith.extf %21 : vector<32x128xbf16> to vector<32x128xf32>
    %23 = arith.mulf %22, %20 : vector<32x128xf32>
    %24 = arith.addf %6, %23 : vector<32x128xf32>
    %25 = tpu.iota {dimensions = array<i32: 1>} : vector<32x128xi32>
    %c8_i32 = arith.constant 8 : i32
    %26 = vector.broadcast %c8_i32 : i32 to vector<32x128xi32>
    %27 = arith.cmpi slt, %25, %26 : vector<32x128xi32>
    %cst_11 = arith.constant 0xFF800000 : f32
    %28 = vector.broadcast %cst_11 : f32 to vector<32x128xf32>
    %29 = arith.select %27, %24, %28 : vector<32x128xi1>, vector<32x128xf32>
    %c0_i32 = arith.constant 0 : i32
    %30 = vector.broadcast %c0_i32 : i32 to vector<32x128xi32>
    %31 = arith.cmpi slt, %25, %30 : vector<32x128xi32>
    %32 = tpu.iota {dimensions = array<i32: 1>} : vector<32x128xi32>
    %c0_i32_12 = arith.constant 0 : i32
    %33 = vector.broadcast %c0_i32_12 : i32 to vector<32x128xi32>
    %cst_13 = arith.constant dense<0xFF800000> : vector<32xf32>
    %34 = vector.multi_reduction <maximumf>, %29, %cst_13 [1] : vector<32x128xf32> to vector<32xf32>
    %35 = vector.shape_cast %34 : vector<32xf32> to vector<32x1xf32>
    %36 = vector.broadcast %35 : vector<32x1xf32> to vector<32x128xf32>
    %37 = arith.cmpf oeq, %29, %36 : vector<32x128xf32>
    %c128_i32 = arith.constant 128 : i32
    %38 = vector.broadcast %c128_i32 : i32 to vector<32x128xi32>
    %39 = arith.select %37, %25, %38 : vector<32x128xi1>, vector<32x128xi32>
    %cst_14 = arith.constant dense<2147483647> : vector<32xi32>
    %40 = vector.multi_reduction <minsi>, %39, %cst_14 [1] : vector<32x128xi32> to vector<32xi32>
    %41 = vector.shape_cast %40 : vector<32xi32> to vector<32x1xi32>
    %42 = vector.broadcast %41 : vector<32x1xi32> to vector<32x128xi32>
    %43 = arith.cmpi eq, %25, %42 : vector<32x128xi32>
    %44 = arith.ori %31, %43 : vector<32x128xi1>
    %cst_15 = arith.constant 0xFF800000 : f32
    %45 = vector.broadcast %cst_15 : f32 to vector<32x128xf32>
    %46 = arith.select %43, %45, %29 : vector<32x128xi1>, vector<32x128xf32>
    %c0_i32_16 = arith.constant 0 : i32
    %47 = vector.broadcast %c0_i32_16 : i32 to vector<32x128xi32>
    %48 = arith.cmpi eq, %32, %47 : vector<32x128xi32>
    %49 = vector.shape_cast %41 : vector<32x1xi32> to vector<32x1xi32>
    %50 = vector.broadcast %49 : vector<32x1xi32> to vector<32x128xi32>
    %51 = arith.select %48, %50, %33 : vector<32x128xi1>, vector<32x128xi32>
    %cst_17 = arith.constant dense<0xFF800000> : vector<32xf32>
    %52 = vector.multi_reduction <maximumf>, %46, %cst_17 [1] : vector<32x128xf32> to vector<32xf32>
    %53 = vector.shape_cast %52 : vector<32xf32> to vector<32x1xf32>
    %54 = vector.broadcast %53 : vector<32x1xf32> to vector<32x128xf32>
    %55 = arith.cmpf oeq, %46, %54 : vector<32x128xf32>
    %c128_i32_18 = arith.constant 128 : i32
    %56 = vector.broadcast %c128_i32_18 : i32 to vector<32x128xi32>
    %57 = arith.select %55, %25, %56 : vector<32x128xi1>, vector<32x128xi32>
    %cst_19 = arith.constant dense<2147483647> : vector<32xi32>
    %58 = vector.multi_reduction <minsi>, %57, %cst_19 [1] : vector<32x128xi32> to vector<32xi32>
    %59 = vector.shape_cast %58 : vector<32xi32> to vector<32x1xi32>
    %60 = vector.broadcast %59 : vector<32x1xi32> to vector<32x128xi32>
    %61 = arith.cmpi eq, %25, %60 : vector<32x128xi32>
    %62 = arith.ori %44, %61 : vector<32x128xi1>
    %c1_i32 = arith.constant 1 : i32
    %63 = vector.broadcast %c1_i32 : i32 to vector<32x128xi32>
    %64 = arith.cmpi eq, %32, %63 : vector<32x128xi32>
    %65 = vector.shape_cast %59 : vector<32x1xi32> to vector<32x1xi32>
    %66 = vector.broadcast %65 : vector<32x1xi32> to vector<32x128xi32>
    %67 = arith.select %64, %66, %51 : vector<32x128xi1>, vector<32x128xi32>
    %68 = arith.trunci %67 : vector<32x128xi32> to vector<32x128xi8>
    %c0_20 = arith.constant 0 : index
    %c0_21 = arith.constant 0 : index
    %69 = vector.load %arg10[%c0_20, %c0_21] : memref<32x128xi8, #tpu.memory_space<vmem>>, vector<32x128xi8>
    tpu.vector_store %arg10[%c0_20, %c0_21], %68 {strides = array<i32>} : memref<32x128xi8, #tpu.memory_space<vmem>>, vector<32x128xi8>,
    %cst_22 = arith.constant 0xFF800000 : f32
    %70 = vector.broadcast %cst_22 : f32 to vector<32x128xf32>
    %71 = arith.select %62, %24, %70 : vector<32x128xi1>, vector<32x128xf32>
    %cst_23 = arith.constant dense<0xFF800000> : vector<32xf32>
    %72 = vector.multi_reduction <maximumf>, %71, %cst_23 [1] : vector<32x128xf32> to vector<32xf32>
    %73 = vector.shape_cast %72 : vector<32xf32> to vector<32x1xf32>
    %74 = vector.broadcast %73 : vector<32x1xf32> to vector<32x128xf32>
    %75 = arith.subf %71, %74 : vector<32x128xf32>
    %76 = math.exp %75 : vector<32x128xf32>
    %cst_24 = arith.constant dense<0.000000e+00> : vector<32xf32>
    %77 = vector.multi_reduction <add>, %76, %cst_24 [1] : vector<32x128xf32> to vector<32xf32>
    %78 = vector.shape_cast %77 : vector<32xf32> to vector<32x1xf32>
    %79 = vector.broadcast %78 : vector<32x1xf32> to vector<32x128xf32>
    %80 = arith.divf %76, %79 : vector<32x128xf32>
    %c0_25 = arith.constant 0 : index
    %c0_26 = arith.constant 0 : index
    %81 = vector.load %arg9[%c0_25, %c0_26] : memref<32x128xf32, #tpu.memory_space<vmem>>, vector<32x128xf32>
    tpu.vector_store %arg9[%c0_25, %c0_26], %80 {strides = array<i32>} : memref<32x128xf32, #tpu.memory_space<vmem>>, vector<32x128xf32>,
    %c0_27 = arith.constant 0 : index
    %c0_28 = arith.constant 0 : index
    %82 = vector.load %arg7[%c0_27, %c0_28] : memref<128x512xf32, #tpu.memory_space<vmem>>, vector<128x512xf32>
    %cst_29 = arith.constant dense<0.000000e+00> : vector<32x512xf32>
    %83 = tpu.matmul %80, %82, %cst_29 {dimension_numbers = #tpu.dot_dimension_numbers<[1], [0], [0], [1], [0, 0, 1, 1], [], []>} : vector<32x128xf32>, vector<128x512xf32>, vector<32x512xf32> -> vector<32x512xf32>
    %84 = arith.mulf %10, %83 : vector<32x512xf32>
    %85 = arith.truncf %84 : vector<32x512xf32> to vector<32x512xbf16>
    %c0_30 = arith.constant 0 : index
    %c0_31 = arith.constant 0 : index
    %86 = vector.load %arg5[%c0_30, %c0_31] : memref<512x32xbf16, #tpu.memory_space<vmem>>, vector<512x32xbf16>
    %cst_32 = arith.constant dense<0.000000e+00> : vector<32x32xf32>
    %87 = tpu.matmul %85, %86, %cst_32 {dimension_numbers = #tpu.dot_dimension_numbers<[1], [0], [0], [1], [0, 0, 1, 1], [], []>} : vector<32x512xbf16>, vector<512x32xbf16>, vector<32x32xf32> -> vector<32x32xf32>
    %c0_33 = arith.constant 0 : index
    %c0_34 = arith.constant 0 : index
    %88 = vector.load %arg6[%c0_33, %c0_34] : memref<128x32xf32, #tpu.memory_space<vmem>>, vector<128x32xf32>
    %cst_35 = arith.constant dense<0.000000e+00> : vector<32x32xf32>
    %89 = tpu.matmul %80, %88, %cst_35 {dimension_numbers = #tpu.dot_dimension_numbers<[1], [0], [0], [1], [0, 0, 1, 1], [], []>} : vector<32x128xf32>, vector<128x32xf32>, vector<32x32xf32> -> vector<32x32xf32>
    %90 = arith.addf %87, %89 : vector<32x32xf32>
    %91 = arith.truncf %90 : vector<32x32xf32> to vector<32x32xbf16>
    %c0_36 = arith.constant 0 : index
    %c0_37 = arith.constant 0 : index
    %92 = vector.load %arg8[%c0_36, %c0_37] : memref<32x32xbf16, #tpu.memory_space<vmem>>, vector<32x32xbf16>
    tpu.vector_store %arg8[%c0_36, %c0_37], %91 {strides = array<i32>} : memref<32x32xbf16, #tpu.memory_space<vmem>>, vector<32x32xbf16>,
    return
  }
  func.func @transform_0(%arg0: i32) -> (i32, i32) {
    %c0_i32 = arith.constant 0 : i32
    %c0_i32_0 = arith.constant 0 : i32
    return %arg0, %c0_i32 : i32, i32
  }
  func.func @transform_1(%arg0: i32) -> (i32, i32) {
    %c0_i32 = arith.constant 0 : i32
    %c0_i32_0 = arith.constant 0 : i32
    %c0_i32_1 = arith.constant 0 : i32
    return %c0_i32, %c0_i32_0 : i32, i32
  }
  func.func @transform_2(%arg0: i32) -> (i32, i32) {
    %c0_i32 = arith.constant 0 : i32
    %c0_i32_0 = arith.constant 0 : i32
    %c0_i32_1 = arith.constant 0 : i32
    return %c0_i32, %c0_i32_0 : i32, i32
  }
  func.func @transform_3(%arg0: i32) -> (i32, i32) {
    %c0_i32 = arith.constant 0 : i32
    %c0_i32_0 = arith.constant 0 : i32
    return %arg0, %c0_i32 : i32, i32
  }
  func.func @transform_4(%arg0: i32) -> (i32, i32) {
    %c0_i32 = arith.constant 0 : i32
    %c0_i32_0 = arith.constant 0 : i32
    %c0_i32_1 = arith.constant 0 : i32
    return %c0_i32, %c0_i32_0 : i32, i32
  }
  func.func @transform_5(%arg0: i32) -> (i32, i32) {
    %c0_i32 = arith.constant 0 : i32
    %c0_i32_0 = arith.constant 0 : i32
    %c0_i32_1 = arith.constant 0 : i32
    return %c0_i32, %c0_i32_0 : i32, i32
  }
  func.func @transform_6(%arg0: i32) -> (i32, i32) {
    %c0_i32 = arith.constant 0 : i32
    %c0_i32_0 = arith.constant 0 : i32
    %c0_i32_1 = arith.constant 0 : i32
    return %c0_i32, %c0_i32_0 : i32, i32
  }
  func.func @transform_7(%arg0: i32) -> (i32, i32) {
    %c0_i32 = arith.constant 0 : i32
    %c0_i32_0 = arith.constant 0 : i32
    return %arg0, %c0_i32 : i32, i32
  }
  func.func @transform_8(%arg0: i32) -> (i32, i32) {
    %c0_i32 = arith.constant 0 : i32
    %c0_i32_0 = arith.constant 0 : i32
    return %arg0, %c0_i32 : i32, i32
  }
  func.func @transform_9(%arg0: i32) -> (i32, i32) {
    %c0_i32 = arith.constant 0 : i32
    %c0_i32_0 = arith.constant 0 : i32
    return %arg0, %c0_i32 : i32, i32
  }
}

</mosaic_0001>

<llo_original>
// kernel: tpu_custom_call.1
$region0: #{tpu_custom_call.1}
  #allocation0 [shape = 'u32[]', space=smem, size = 0x4, offset = 0x4, fixed_abs, tag = 'smem constant byte address 0x4 - core index']
  #allocation1 [shape = 'u32[72,128]{1,0:T(1,128)}', space=vmem, size = 0x9000, scoped, tag = 'internal scratch']
  %s0 = inlined_call_operand.vmem [shape: bf16[32,32], index: 0, kind: input, shape index: {}]
  %s1 = inlined_call_operand.vmem [shape: bf16[32,768], index: 1, kind: input, shape index: {}]
  %s2 = inlined_call_operand.vmem [shape: f32[1,768], index: 2, kind: input, shape index: {}]
  %s3 = inlined_call_operand.vmem [shape: bf16[32,128], index: 3, kind: input, shape index: {}]
  %s4 = inlined_call_operand.vmem [shape: bf16[512,32], index: 4, kind: input, shape index: {}]
  %s5 = inlined_call_operand.vmem [shape: f32[128,32], index: 5, kind: input, shape index: {}]
  %s6 = inlined_call_operand.hbm [shape: f32[128,512], index: 6, kind: input, shape index: {}]
  %s7 = inlined_call_operand.hbm [shape: bf16[32,32], index: 7, kind: output, shape index: {0}]
  %s8 = inlined_call_operand.hbm [shape: f32[32,128], index: 8, kind: output, shape index: {1}]
  %s9 = inlined_call_operand.hbm [shape: s8[32,128], index: 9, kind: output, shape index: {2}]
  %10 = xla_tuple %s7, %s8, %s9
  %s11 = sld [smem:[#allocation0]]
  $region58: #{tpu_custom_call.1} parent=0
    _
  %s13 = ssub.s32 1, %s11
  %s14 = scalar_select 0, %s13, %s11
  $region1: #{tpu_custom_call.1} parent=0
    #allocation2 [shape = 'u8[262144]{0}', space=vmem, size = 0x40000, scoped, tag = 'input window, operand 6, single buffered']
    #allocation3 [shape = 's32[1]{0}', space=sflag, size = 0x4, scoped, tag = 'scoped memory for tpu_custom_call.1']
    #allocation4 [shape = 's32[1]{0}', space=sflag, size = 0x4, scoped, tag = 'scoped memory for tpu_custom_call.1']
    #allocation5 [shape = 'u8[8192]{0}', space=vmem, size = 0x2000, scoped, tag = 'output window, operand 0, single buffered']
    #allocation6 [shape = 'u8[16384]{0}', space=vmem, size = 0x4000, scoped, tag = 'output window, operand 1, single buffered']
    #allocation7 [shape = 's32[1]{0}', space=sflag, size = 0x4, scoped, tag = 'scoped memory for tpu_custom_call.1']
    #allocation8 [shape = 'u8[4096]{0}', space=vmem, size = 0x1000, scoped, tag = 'output window, operand 2, single buffered']
    %15 = vsyncpa [#allocation3], 0
    %16 = vsyncpa [#allocation4], 0
    %17 = vsyncpa [#allocation7], 0
    // Predicated region
    $region2: #{tpu_custom_call.1} parent=1 // pred_check
      _
    $region3: #{tpu_custom_call.1} parent=1 // pred_check_branch
      %19 = sbr.rel (0) target = $region5
    $region4: #{tpu_custom_call.1} parent=1 // pred_region
      _
    $region5: #{tpu_custom_call.1} parent=1 // pred_fallthru
      _
    // Predicated region
    $region6: #{tpu_custom_call.1} parent=1 // pred_check
      _
    $region7: #{tpu_custom_call.1} parent=1 // pred_check_branch
      %21 = sbr.rel (0) target = $region9
    $region8: #{tpu_custom_call.1} parent=1 // pred_region
      _
    $region9: #{tpu_custom_call.1} parent=1 // pred_fallthru
      _
    // Predicated region
    $region10: #{tpu_custom_call.1} parent=1 // pred_check
      _
    $region11: #{tpu_custom_call.1} parent=1 // pred_check_branch
      %23 = sbr.rel (0) target = $region13
    $region12: #{tpu_custom_call.1} parent=1 // pred_region
      _
    $region13: #{tpu_custom_call.1} parent=1 // pred_fallthru
      _
    // Predicated region
    $region14: #{tpu_custom_call.1} parent=1 // pred_check
      _
    $region15: #{tpu_custom_call.1} parent=1 // pred_check_branch
      %25 = sbr.rel (0) target = $region17
    $region16: #{tpu_custom_call.1} parent=1 // pred_region
      _
    $region17: #{tpu_custom_call.1} parent=1 // pred_fallthru
      _
    // Predicated region
    $region18: #{tpu_custom_call.1} parent=1 // pred_check
      _
    $region19: #{tpu_custom_call.1} parent=1 // pred_check_branch
      %27 = sbr.rel (0) target = $region21
    $region20: #{tpu_custom_call.1} parent=1 // pred_region
      _
    $region21: #{tpu_custom_call.1} parent=1 // pred_fallthru
      _
    // Predicated region
    $region22: #{tpu_custom_call.1} parent=1 // pred_check
      _
    $region23: #{tpu_custom_call.1} parent=1 // pred_check_branch
      %29 = sbr.rel (0) target = $region25
    $region24: #{tpu_custom_call.1} parent=1 // pred_region
      _
    $region25: #{tpu_custom_call.1} parent=1 // pred_fallthru
      _
    // Predicated region
    $region26: #{tpu_custom_call.1} parent=1 // pred_check
      _
    $region27: #{tpu_custom_call.1} parent=1 // pred_check_branch
      %31 = sbr.rel (0) target = $region29
    $region28: #{tpu_custom_call.1} parent=1 // pred_region
      %33 = vsyncadd [#allocation3], 0
      %s34 = sshll.u32 %s6, 4
      %s35 = int_to_ptr.hbm [resolvable:$true] %s34
      %s36 = sshll.u32 [#allocation2], 4
      %s37 = int_to_ptr.vmem [resolvable:$true] %s36
      %42 = dma.hbm_to_vmem [thread:$0]  %s35, 8192, %s37, [#allocation3], 512, 512, 32
    $region29: #{tpu_custom_call.1} parent=1 // pred_fallthru
      _
    // Predicated region
    $region30: #{tpu_custom_call.1} parent=1 // pred_check
      _
    $region31: #{tpu_custom_call.1} parent=1 // pred_check_branch
      %44 = sbr.rel (0) target = $region33
    $region32: #{tpu_custom_call.1} parent=1 // pred_region
      %46 = dma.done [#allocation3], 8192
    $region33: #{tpu_custom_call.1} parent=1 // pred_fallthru
      _
    %v48 = vld [vmem:[%s0] sm:$0xf]
    %v49 = vld [vmem:[%s0 + $0x4] sm:$0xf]
    %v50 = vld [vmem:[%s0 + $0x8] sm:$0xf]
    %v51 = vld [vmem:[%s0 + $0xc] sm:$0xf]
    %v52 = vld [vmem:[%s1] sm:$0xff]
    %v53 = vld [vmem:[%s1 + $0x8] sm:$0xff]
    %v54 = vld [vmem:[%s1 + $0x10] sm:$0xff]
    %v55 = vld [vmem:[%s1 + $0x18] sm:$0xff]
    %v56 = vld [vmem:[%s1 + $0x20] sm:$0xff]
    %v57 = vld [vmem:[%s1 + $0x28] sm:$0xff]
    %v58 = vld [vmem:[%s1 + $0x30] sm:$0xff]
    %v59 = vld [vmem:[%s1 + $0x38] sm:$0xff]
    %v60 = vld [vmem:[%s1 + $0x40] sm:$0xff]
    %v61 = vld [vmem:[%s1 + $0x48] sm:$0xff]
    %v62 = vld [vmem:[%s1 + $0x50] sm:$0xff]
    %v63 = vld [vmem:[%s1 + $0x58] sm:$0xff]
    %v64 = vld [vmem:[%s2] sm:$0x3f]
    %v66 = vperm.slane %v64, 0
    %v67 = vperm.slane %v64, 1
    %v68 = vperm.slane %v64, 2
    %v69 = vperm.slane %v64, 3
    %v70 = vperm.slane %v64, 4
    %v71 = vperm.slane %v64, 5
    %v82 = vunpack.c.l.b16 %v48
    %v83 = vunpack.c.l.b16 %v49
    %v84 = vunpack.c.l.b16 %v50
    %v85 = vunpack.c.l.b16 %v51
    %v86 = vpack.c.b16 %v83, %v82
    %v87 = vpack.c.b16 %v85, %v84
    %v100 = vunpack.c.l.b16 %v52
    %v101 = vunpack.c.h.b16 %v52
    %v102 = vunpack.c.l.b16 %v53
    %v103 = vunpack.c.h.b16 %v53
    %v104 = vunpack.c.l.b16 %v54
    %v105 = vunpack.c.h.b16 %v54
    %v106 = vunpack.c.l.b16 %v55
    %v107 = vunpack.c.h.b16 %v55
    %v108 = vunpack.c.l.b16 %v56
    %v109 = vunpack.c.h.b16 %v56
    %v110 = vunpack.c.l.b16 %v57
    %v111 = vunpack.c.h.b16 %v57
    %v112 = vunpack.c.l.b16 %v58
    %v113 = vunpack.c.h.b16 %v58
    %v114 = vunpack.c.l.b16 %v59
    %v115 = vunpack.c.h.b16 %v59
    %v116 = vunpack.c.l.b16 %v60
    %v117 = vunpack.c.h.b16 %v60
    %v118 = vunpack.c.l.b16 %v61
    %v119 = vunpack.c.h.b16 %v61
    %v120 = vunpack.c.l.b16 %v62
    %v121 = vunpack.c.h.b16 %v62
    %v122 = vunpack.c.l.b16 %v63
    %v123 = vunpack.c.h.b16 %v63
    %v124 = vpack.c.b16 %v106, %v100
    %v125 = vpack.c.b16 %v107, %v101
    %v126 = vpack.c.b16 %v108, %v102
    %v127 = vpack.c.b16 %v109, %v103
    %v128 = vpack.c.b16 %v110, %v104
    %v129 = vpack.c.b16 %v111, %v105
    %v130 = vpack.c.b16 %v118, %v112
    %v131 = vpack.c.b16 %v119, %v113
    %v132 = vpack.c.b16 %v120, %v114
    %v133 = vpack.c.b16 %v121, %v115
    %v134 = vpack.c.b16 %v122, %v116
    %v135 = vpack.c.b16 %v123, %v117
    %vm148 = vcmask 261120
    %v150 = vsel %vm148, %v86, 0
    %v153 = vsel %vm148, %v87, 0
    %155 = vmatpush.bf16.msra.mxu0 0
    %156 = vmatpush.bf16.msra.mxu0 0
    %157 = vmatpush.bf16.msra.mxu0 0
    %158 = vmatpush.bf16.msra.mxu0 0
    %159 = vmatpush.bf16.msra.mxu0 0
    %160 = vmatpush.bf16.msra.mxu0 0
    %161 = vmatpush.bf16.msra.mxu0 %v130
    %162 = vmatpush.bf16.msra.mxu0 %v124
    %163 = vmatmul.bf16.gmra.mxu0 %v150
    %v164 = vpop.f32.mrf.mxu0
    %v165 = vadd.f32 %v66, %v164
    %v166 = vpop.f32.mrf.mxu0
    %v167 = vadd.f32 %v66, %v166
    %168 = vmatmul.bf16.gmra.mxu0 %v153
    %v169 = vpop.f32.mrf.mxu0
    %v170 = vadd.f32 %v66, %v169
    %v171 = vpop.f32.mrf.mxu0
    %v172 = vadd.f32 %v66, %v171
    %173 = vdwg.mxu0
    %174 = vmatpush.bf16.msra.mxu0 0
    %175 = vmatpush.bf16.msra.mxu0 0
    %176 = vmatpush.bf16.msra.mxu0 0
    %177 = vmatpush.bf16.msra.mxu0 0
    %178 = vmatpush.bf16.msra.mxu0 0
    %179 = vmatpush.bf16.msra.mxu0 0
    %180 = vmatpush.bf16.msra.mxu0 %v131
    %181 = vmatpush.bf16.msra.mxu0 %v125
    %182 = vmatmul.bf16.gmra.mxu0 %v150
    %v183 = vpop.f32.mrf.mxu0
    %v184 = vadd.f32 %v67, %v183
    %v185 = vpop.f32.mrf.mxu0
    %v186 = vadd.f32 %v67, %v185
    %187 = vmatmul.bf16.gmra.mxu0 %v153
    %v188 = vpop.f32.mrf.mxu0
    %v189 = vadd.f32 %v67, %v188
    %v190 = vpop.f32.mrf.mxu0
    %v191 = vadd.f32 %v67, %v190
    %192 = vdwg.mxu0
    %193 = vmatpush.bf16.msra.mxu0 0
    %194 = vmatpush.bf16.msra.mxu0 0
    %195 = vmatpush.bf16.msra.mxu0 0
    %196 = vmatpush.bf16.msra.mxu0 0
    %197 = vmatpush.bf16.msra.mxu0 0
    %198 = vmatpush.bf16.msra.mxu0 0
    %199 = vmatpush.bf16.msra.mxu0 %v132
    %200 = vmatpush.bf16.msra.mxu0 %v126
    %201 = vmatmul.bf16.gmra.mxu0 %v150
    %v202 = vpop.f32.mrf.mxu0
    %v203 = vadd.f32 %v68, %v202
    %v204 = vpop.f32.mrf.mxu0
    %v205 = vadd.f32 %v68, %v204
    %206 = vmatmul.bf16.gmra.mxu0 %v153
    %v207 = vpop.f32.mrf.mxu0
    %v208 = vadd.f32 %v68, %v207
    %v209 = vpop.f32.mrf.mxu0
    %v210 = vadd.f32 %v68, %v209
    %211 = vdwg.mxu0
    %212 = vmatpush.bf16.msra.mxu0 0
    %213 = vmatpush.bf16.msra.mxu0 0
    %214 = vmatpush.bf16.msra.mxu0 0
    %215 = vmatpush.bf16.msra.mxu0 0
    %216 = vmatpush.bf16.msra.mxu0 0
    %217 = vmatpush.bf16.msra.mxu0 0
    %218 = vmatpush.bf16.msra.mxu0 %v133
    %219 = vmatpush.bf16.msra.mxu0 %v127
    %220 = vmatmul.bf16.gmra.mxu0 %v150
    %v221 = vpop.f32.mrf.mxu0
    %v222 = vadd.f32 %v69, %v221
    %v223 = vpop.f32.mrf.mxu0
    %v224 = vadd.f32 %v69, %v223
    %225 = vmatmul.bf16.gmra.mxu0 %v153
    %v226 = vpop.f32.mrf.mxu0
    %v227 = vadd.f32 %v69, %v226
    %v228 = vpop.f32.mrf.mxu0
    %v229 = vadd.f32 %v69, %v228
    %230 = vdwg.mxu0
    %231 = vmatpush.bf16.msra.mxu0 0
    %232 = vmatpush.bf16.msra.mxu0 0
    %233 = vmatpush.bf16.msra.mxu0 0
    %234 = vmatpush.bf16.msra.mxu0 0
    %235 = vmatpush.bf16.msra.mxu0 0
    %236 = vmatpush.bf16.msra.mxu0 0
    %237 = vmatpush.bf16.msra.mxu0 %v134
    %238 = vmatpush.bf16.msra.mxu0 %v128
    %239 = vmatmul.bf16.gmra.mxu0 %v150
    %v240 = vpop.f32.mrf.mxu0
    %v241 = vadd.f32 %v70, %v240
    %v242 = vpop.f32.mrf.mxu0
    %v243 = vadd.f32 %v70, %v242
    %244 = vmatmul.bf16.gmra.mxu0 %v153
    %v245 = vpop.f32.mrf.mxu0
    %v246 = vadd.f32 %v70, %v245
    %v247 = vpop.f32.mrf.mxu0
    %v248 = vadd.f32 %v70, %v247
    %249 = vdwg.mxu0
    %250 = vmatpush.bf16.msra.mxu0 0
    %251 = vmatpush.bf16.msra.mxu0 0
    %252 = vmatpush.bf16.msra.mxu0 0
    %253 = vmatpush.bf16.msra.mxu0 0
    %254 = vmatpush.bf16.msra.mxu0 0
    %255 = vmatpush.bf16.msra.mxu0 0
    %256 = vmatpush.bf16.msra.mxu0 %v135
    %257 = vmatpush.bf16.msra.mxu0 %v129
    %258 = vmatmul.bf16.gmra.mxu0 %v150
    %v259 = vpop.f32.mrf.mxu0
    %v260 = vadd.f32 %v71, %v259
    %v261 = vpop.f32.mrf.mxu0
    %v262 = vadd.f32 %v71, %v261
    %263 = vmatmul.bf16.gmra.mxu0 %v153
    %v264 = vpop.f32.mrf.mxu0
    %v265 = vadd.f32 %v71, %v264
    %v266 = vpop.f32.mrf.mxu0
    %v267 = vadd.f32 %v71, %v266
    %268 = vdwg.mxu0
    %v269 = vmax.f32 %v203, 0.0
    %v270 = vmax.f32 %v222, 0.0
    %v271 = vmax.f32 %v241, 0.0
    %v272 = vmax.f32 %v260, 0.0
    %v273 = vmax.f32 %v205, 0.0
    %v274 = vmax.f32 %v224, 0.0
    %v275 = vmax.f32 %v243, 0.0
    %v276 = vmax.f32 %v262, 0.0
    %v277 = vmax.f32 %v208, 0.0
    %v278 = vmax.f32 %v227, 0.0
    %v279 = vmax.f32 %v246, 0.0
    %v280 = vmax.f32 %v265, 0.0
    %v281 = vmax.f32 %v210, 0.0
    %v282 = vmax.f32 %v229, 0.0
    %v283 = vmax.f32 %v248, 0.0
    %v284 = vmax.f32 %v267, 0.0
    %v285 = vmax.f32 %v184, 0.0
    %v286 = vmax.f32 %v186, 0.0
    %v287 = vmax.f32 %v189, 0.0
    %v288 = vmax.f32 %v191, 0.0
    %v289 = vand.u32 2147483647, %v184
    %v290 = vand.u32 2147483647, %v186
    %v291 = vand.u32 2147483647, %v189
    %v292 = vand.u32 2147483647, %v191
    %v293 = vsub.f32 0.0, %v289
    %v294 = vsub.f32 0.0, %v290
    %v295 = vsub.f32 0.0, %v291
    %v296 = vsub.f32 0.0, %v292
    %v297 = vmul.f32 %v293, 1.442695
    %v298 = vpow.pop %v297
    %v299 = vmul.f32 %v294, 1.442695
    %v300 = vpow.pop %v299
    %v301 = vmul.f32 %v295, 1.442695
    %v302 = vpow.pop %v301
    %v303 = vmul.f32 %v296, 1.442695
    %v304 = vpow.pop %v303
    %v305 = vadd.f32 %v298, 1.0
    %v306 = vadd.f32 %v300, 1.0
    %v307 = vadd.f32 %v302, 1.0
    %v308 = vadd.f32 %v304, 1.0
    %v309 = vlog2.pop %v305
    %v310 = vmul.f32 %v309, 0.6931472
    %v311 = vlog2.pop %v306
    %v312 = vmul.f32 %v311, 0.6931472
    %v313 = vlog2.pop %v307
    %v314 = vmul.f32 %v313, 0.6931472
    %v315 = vlog2.pop %v308
    %v316 = vmul.f32 %v315, 0.6931472
    %v317 = vadd.f32 %v285, %v310
    %v318 = vadd.f32 %v286, %v312
    %v319 = vadd.f32 %v287, %v314
    %v320 = vadd.f32 %v288, %v316
    %v321 = vld [vmem:[%s3] sm:$0xf]
    %v322 = vld [vmem:[%s3 + $0x4] sm:$0xf]
    %v323 = vld [vmem:[%s3 + $0x8] sm:$0xf]
    %v324 = vld [vmem:[%s3 + $0xc] sm:$0xf]
    %v325 = vunpack.c.l.bf16 %v321
    %v326 = vunpack.c.l.bf16 %v322
    %v327 = vunpack.c.l.bf16 %v323
    %v328 = vunpack.c.l.bf16 %v324
    %v329 = vmul.f32 %v325, %v317
    %v330 = vmul.f32 %v326, %v318
    %v331 = vmul.f32 %v327, %v319
    %v332 = vmul.f32 %v328, %v320
    %v333 = vadd.f32 %v165, %v329
    %v334 = vadd.f32 %v167, %v330
    %v335 = vadd.f32 %v170, %v331
    %v336 = vadd.f32 %v172, %v332
    %v337 = vlaneseq
    %v338 = vand.u32 %v337, 127
    %vm339 = vcmp.lt.s32.totalorder %v338, 8
    %v340 = vsel %vm339, %v333, -inf
    %v341 = vsel %vm339, %v334, -inf
    %v342 = vsel %vm339, %v335, -inf
    %v343 = vsel %vm339, %v336, -inf
    %vm344 = vcmp.lt.s32.totalorder %v338, 0
    %345 = vmax.xlane.f32.xlu0 %v340
    %v346 = vpop.xlane.xlu0 %345
    %347 = vmax.xlane.f32.xlu0 %v341
    %v348 = vpop.xlane.xlu0 %347
    %349 = vmax.xlane.f32.xlu0 %v342
    %v350 = vpop.xlane.xlu0 %349
    %351 = vmax.xlane.f32.xlu0 %v343
    %v352 = vpop.xlane.xlu0 %351
    %vm353 = vcmp.eq.f32.partialorder %v340, %v346
    %vm354 = vcmp.eq.f32.partialorder %v341, %v348
    %vm355 = vcmp.eq.f32.partialorder %v342, %v350
    %vm356 = vcmp.eq.f32.partialorder %v343, %v352
    %v357 = vsel %vm353, %v338, 128
    %v358 = vsel %vm354, %v338, 128
    %v359 = vsel %vm355, %v338, 128
    %v360 = vsel %vm356, %v338, 128
    %v361 = vand.u32 %v357, 65535
    %v362 = vshra.s32 %v357, 16
    %v363 = vcvt.s32.f32 %v361
    %v364 = vcvt.s32.f32 %v362
    %365 = vmin.xlane.f32.xlu0 %v364
    %v366 = vpop.xlane.xlu0 %365
    %vm367 = vcmp.eq.f32.partialorder %v364, %v366
    %v368 = vsel %vm367, %v363, inf
    %369 = vmin.xlane.f32.xlu0 %v368
    %v370 = vpop.xlane.xlu0 %369
    %v371 = vcvt.f32.s32 %v370
    %v372 = vcvt.f32.s32 %v366
    %v373 = vshll.u32 %v372, 16
    %v374 = vadd.s32 %v373, %v371
    %v375 = vand.u32 %v358, 65535
    %v376 = vshra.s32 %v358, 16
    %v377 = vcvt.s32.f32 %v375
    %v378 = vcvt.s32.f32 %v376
    %379 = vmin.xlane.f32.xlu0 %v378
    %v380 = vpop.xlane.xlu0 %379
    %vm381 = vcmp.eq.f32.partialorder %v378, %v380
    %v382 = vsel %vm381, %v377, inf
    %383 = vmin.xlane.f32.xlu0 %v382
    %v384 = vpop.xlane.xlu0 %383
    %v385 = vcvt.f32.s32 %v384
    %v386 = vcvt.f32.s32 %v380
    %v387 = vshll.u32 %v386, 16
    %v388 = vadd.s32 %v387, %v385
    %v389 = vand.u32 %v359, 65535
    %v390 = vshra.s32 %v359, 16
    %v391 = vcvt.s32.f32 %v389
    %v392 = vcvt.s32.f32 %v390
    %393 = vmin.xlane.f32.xlu0 %v392
    %v394 = vpop.xlane.xlu0 %393
    %vm395 = vcmp.eq.f32.partialorder %v392, %v394
    %v396 = vsel %vm395, %v391, inf
    %397 = vmin.xlane.f32.xlu0 %v396
    %v398 = vpop.xlane.xlu0 %397
    %v399 = vcvt.f32.s32 %v398
    %v400 = vcvt.f32.s32 %v394
    %v401 = vshll.u32 %v400, 16
    %v402 = vadd.s32 %v401, %v399
    %v403 = vand.u32 %v360, 65535
    %v404 = vshra.s32 %v360, 16
    %v405 = vcvt.s32.f32 %v403
    %v406 = vcvt.s32.f32 %v404
    %407 = vmin.xlane.f32.xlu0 %v406
    %v408 = vpop.xlane.xlu0 %407
    %vm409 = vcmp.eq.f32.partialorder %v406, %v408
    %v410 = vsel %vm409, %v405, inf
    %411 = vmin.xlane.f32.xlu0 %v410
    %v412 = vpop.xlane.xlu0 %411
    %v413 = vcvt.f32.s32 %v412
    %v414 = vcvt.f32.s32 %v408
    %v415 = vshll.u32 %v414, 16
    %v416 = vadd.s32 %v415, %v413
    %vm417 = vcmp.eq.s32.totalorder %v338, %v374
    %vm418 = vcmp.eq.s32.totalorder %v338, %v388
    %vm419 = vcmp.eq.s32.totalorder %v338, %v402
    %vm420 = vcmp.eq.s32.totalorder %v338, %v416
    %vm421 = vmor %vm344, %vm417
    %vm422 = vmor %vm344, %vm418
    %vm423 = vmor %vm344, %vm419
    %vm424 = vmor %vm344, %vm420
    %v425 = vsel %vm417, -inf, %v340
    %v426 = vsel %vm418, -inf, %v341
    %v427 = vsel %vm419, -inf, %v342
    %v428 = vsel %vm420, -inf, %v343
    %vm429 = vcmp.eq.s32.totalorder %v338, 0
    %v430 = vsel %vm429, %v374, 0
    %v431 = vsel %vm429, %v388, 0
    %v432 = vsel %vm429, %v402, 0
    %v433 = vsel %vm429, %v416, 0
    %434 = vmax.xlane.f32.xlu0 %v425
    %v435 = vpop.xlane.xlu0 %434
    %436 = vmax.xlane.f32.xlu0 %v426
    %v437 = vpop.xlane.xlu0 %436
    %438 = vmax.xlane.f32.xlu0 %v427
    %v439 = vpop.xlane.xlu0 %438
    %440 = vmax.xlane.f32.xlu0 %v428
    %v441 = vpop.xlane.xlu0 %440
    %vm442 = vcmp.eq.f32.partialorder %v425, %v435
    %vm443 = vcmp.eq.f32.partialorder %v426, %v437
    %vm444 = vcmp.eq.f32.partialorder %v427, %v439
    %vm445 = vcmp.eq.f32.partialorder %v428, %v441
    %v446 = vsel %vm442, %v338, 128
    %v447 = vsel %vm443, %v338, 128
    %v448 = vsel %vm444, %v338, 128
    %v449 = vsel %vm445, %v338, 128
    %v450 = vand.u32 %v446, 65535
    %v451 = vshra.s32 %v446, 16
    %v452 = vcvt.s32.f32 %v450
    %v453 = vcvt.s32.f32 %v451
    %454 = vmin.xlane.f32.xlu0 %v453
    %v455 = vpop.xlane.xlu0 %454
    %vm456 = vcmp.eq.f32.partialorder %v453, %v455
    %v457 = vsel %vm456, %v452, inf
    %458 = vmin.xlane.f32.xlu0 %v457
    %v459 = vpop.xlane.xlu0 %458
    %v460 = vcvt.f32.s32 %v459
    %v461 = vcvt.f32.s32 %v455
    %v462 = vshll.u32 %v461, 16
    %v463 = vadd.s32 %v462, %v460
    %v464 = vand.u32 %v447, 65535
    %v465 = vshra.s32 %v447, 16
    %v466 = vcvt.s32.f32 %v464
    %v467 = vcvt.s32.f32 %v465
    %468 = vmin.xlane.f32.xlu0 %v467
    %v469 = vpop.xlane.xlu0 %468
    %vm470 = vcmp.eq.f32.partialorder %v467, %v469
    %v471 = vsel %vm470, %v466, inf
    %472 = vmin.xlane.f32.xlu0 %v471
    %v473 = vpop.xlane.xlu0 %472
    %v474 = vcvt.f32.s32 %v473
    %v475 = vcvt.f32.s32 %v469
    %v476 = vshll.u32 %v475, 16
    %v477 = vadd.s32 %v476, %v474
    %v478 = vand.u32 %v448, 65535
    %v479 = vshra.s32 %v448, 16
    %v480 = vcvt.s32.f32 %v478
    %v481 = vcvt.s32.f32 %v479
    %482 = vmin.xlane.f32.xlu0 %v481
    %v483 = vpop.xlane.xlu0 %482
    %vm484 = vcmp.eq.f32.partialorder %v481, %v483
    %v485 = vsel %vm484, %v480, inf
    %486 = vmin.xlane.f32.xlu0 %v485
    %v487 = vpop.xlane.xlu0 %486
    %v488 = vcvt.f32.s32 %v487
    %v489 = vcvt.f32.s32 %v483
    %v490 = vshll.u32 %v489, 16
    %v491 = vadd.s32 %v490, %v488
    %v492 = vand.u32 %v449, 65535
    %v493 = vshra.s32 %v449, 16
    %v494 = vcvt.s32.f32 %v492
    %v495 = vcvt.s32.f32 %v493
    %496 = vmin.xlane.f32.xlu0 %v495
    %v497 = vpop.xlane.xlu0 %496
    %vm498 = vcmp.eq.f32.partialorder %v495, %v497
    %v499 = vsel %vm498, %v494, inf
    %500 = vmin.xlane.f32.xlu0 %v499
    %v501 = vpop.xlane.xlu0 %500
    %v502 = vcvt.f32.s32 %v501
    %v503 = vcvt.f32.s32 %v497
    %v504 = vshll.u32 %v503, 16
    %v505 = vadd.s32 %v504, %v502
    %vm506 = vcmp.eq.s32.totalorder %v338, %v463
    %vm507 = vcmp.eq.s32.totalorder %v338, %v477
    %vm508 = vcmp.eq.s32.totalorder %v338, %v491
    %vm509 = vcmp.eq.s32.totalorder %v338, %v505
    %vm510 = vmor %vm421, %vm506
    %vm511 = vmor %vm422, %vm507
    %vm512 = vmor %vm423, %vm508
    %vm513 = vmor %vm424, %vm509
    %vm514 = vcmp.eq.s32.totalorder %v338, 1
    %v515 = vsel %vm514, %v463, %v430
    %v516 = vsel %vm514, %v477, %v431
    %v517 = vsel %vm514, %v491, %v432
    %v518 = vsel %vm514, %v505, %v433
    %v519 = vpack.c.b16 %v516, %v515
    %v520 = vpack.c.b16 %v518, %v517
    %v521 = vpack.c.b8 %v520, %v519
    %522 = vst [vmem:[#allocation8] sm:$0xff] %v521
    %v523 = vsel %vm510, %v333, -inf
    %v524 = vsel %vm511, %v334, -inf
    %v525 = vsel %vm512, %v335, -inf
    %v526 = vsel %vm513, %v336, -inf
    %527 = vmax.xlane.f32.xlu0 %v523
    %v528 = vpop.xlane.xlu0 %527
    %529 = vmax.xlane.f32.xlu0 %v524
    %v530 = vpop.xlane.xlu0 %529
    %531 = vmax.xlane.f32.xlu0 %v525
    %v532 = vpop.xlane.xlu0 %531
    %533 = vmax.xlane.f32.xlu0 %v526
    %v534 = vpop.xlane.xlu0 %533
    %v535 = vsub.f32 %v523, %v528
    %v536 = vsub.f32 %v524, %v530
    %v537 = vsub.f32 %v525, %v532
    %v538 = vsub.f32 %v526, %v534
    %v539 = vmul.f32 %v535, 1.442695
    %v540 = vpow.pop %v539
    %v541 = vmul.f32 %v536, 1.442695
    %v542 = vpow.pop %v541
    %v543 = vmul.f32 %v537, 1.442695
    %v544 = vpow.pop %v543
    %v545 = vmul.f32 %v538, 1.442695
    %v546 = vpow.pop %v545
    %547 = vadd.xlane.f32.xlu0 %v540
    %v548 = vpop.xlane.xlu0 %547
    %549 = vadd.xlane.f32.xlu0 %v542
    %v550 = vpop.xlane.xlu0 %549
    %551 = vadd.xlane.f32.xlu0 %v544
    %v552 = vpop.xlane.xlu0 %551
    %553 = vadd.xlane.f32.xlu0 %v546
    %v554 = vpop.xlane.xlu0 %553
    %v555 = vrcp.pop %v548
    %v556 = vmul.f32 %v548, %v555
    %v557 = vsub.f32 1.0, %v556
    %v558 = vmul.f32 %v555, %v557
    %v559 = vadd.f32 %v555, %v558
    %vm560 = vweird.f32 %v548
    %vm561 = vweird.f32 %v555
    %vm562 = vmor %vm560, %vm561
    %v563 = vsel %vm562, %v555, %v559
    %v564 = vand.u32 2147483647, %v548
    %vm565 = vcmp.eq.f32.partialorder %v564, 8.507059e+37
    %v566 = vand.u32 %v548, 2147483648
    %v567 = vor.u32 1.1754944e-38, %v566
    %v568 = vsel %vm565, %v567, %v563
    %v569 = vmul.f32 %v540, %v568
    %v570 = vrcp.pop %v550
    %v571 = vmul.f32 %v550, %v570
    %v572 = vsub.f32 1.0, %v571
    %v573 = vmul.f32 %v570, %v572
    %v574 = vadd.f32 %v570, %v573
    %vm575 = vweird.f32 %v550
    %vm576 = vweird.f32 %v570
    %vm577 = vmor %vm575, %vm576
    %v578 = vsel %vm577, %v570, %v574
    %v579 = vand.u32 2147483647, %v550
    %vm580 = vcmp.eq.f32.partialorder %v579, 8.507059e+37
    %v581 = vand.u32 %v550, 2147483648
    %v582 = vor.u32 1.1754944e-38, %v581
    %v583 = vsel %vm580, %v582, %v578
    %v584 = vmul.f32 %v542, %v583
    %v585 = vrcp.pop %v552
    %v586 = vmul.f32 %v552, %v585
    %v587 = vsub.f32 1.0, %v586
    %v588 = vmul.f32 %v585, %v587
    %v589 = vadd.f32 %v585, %v588
    %vm590 = vweird.f32 %v552
    %vm591 = vweird.f32 %v585
    %vm592 = vmor %vm590, %vm591
    %v593 = vsel %vm592, %v585, %v589
    %v594 = vand.u32 2147483647, %v552
    %vm595 = vcmp.eq.f32.partialorder %v594, 8.507059e+37
    %v596 = vand.u32 %v552, 2147483648
    %v597 = vor.u32 1.1754944e-38, %v596
    %v598 = vsel %vm595, %v597, %v593
    %v599 = vmul.f32 %v544, %v598
    %v600 = vrcp.pop %v554
    %v601 = vmul.f32 %v554, %v600
    %v602 = vsub.f32 1.0, %v601
    %v603 = vmul.f32 %v600, %v602
    %v604 = vadd.f32 %v600, %v603
    %vm605 = vweird.f32 %v554
    %vm606 = vweird.f32 %v600
    %vm607 = vmor %vm605, %vm606
    %v608 = vsel %vm607, %v600, %v604
    %v609 = vand.u32 2147483647, %v554
    %vm610 = vcmp.eq.f32.partialorder %v609, 8.507059e+37
    %v611 = vand.u32 %v554, 2147483648
    %v612 = vor.u32 1.1754944e-38, %v611
    %v613 = vsel %vm610, %v612, %v608
    %v614 = vmul.f32 %v546, %v613
    %615 = vst [vmem:[#allocation6] sm:$0xff] %v569
    %616 = vst [vmem:[#allocation6 + $0x8] sm:$0xff] %v584
    %617 = vst [vmem:[#allocation6 + $0x10] sm:$0xff] %v599
    %618 = vst [vmem:[#allocation6 + $0x18] sm:$0xff] %v614
    %v619 = vld [vmem:[#allocation2] sm:$0xff]
    %v620 = vld [vmem:[#allocation2 + $0x8] sm:$0xff]
    %v621 = vld [vmem:[#allocation2 + $0x10] sm:$0xff]
    %v622 = vld [vmem:[#allocation2 + $0x18] sm:$0xff]
    %v623 = vld [vmem:[#allocation2 + $0x20] sm:$0xff]
    %v624 = vld [vmem:[#allocation2 + $0x28] sm:$0xff]
    %v625 = vld [vmem:[#allocation2 + $0x30] sm:$0xff]
    %v626 = vld [vmem:[#allocation2 + $0x38] sm:$0xff]
    %v627 = vld [vmem:[#allocation2 + $0x40] sm:$0xff]
    %v628 = vld [vmem:[#allocation2 + $0x48] sm:$0xff]
    %v629 = vld [vmem:[#allocation2 + $0x50] sm:$0xff]
    %v630 = vld [vmem:[#allocation2 + $0x58] sm:$0xff]
    %v631 = vld [vmem:[#allocation2 + $0x60] sm:$0xff]
    %v632 = vld [vmem:[#allocation2 + $0x68] sm:$0xff]
    %v633 = vld [vmem:[#allocation2 + $0x70] sm:$0xff]
    %v634 = vld [vmem:[#allocation2 + $0x78] sm:$0xff]
    %v635 = vld [vmem:[#allocation2 + $0x80] sm:$0xff]
    %v636 = vld [vmem:[#allocation2 + $0x88] sm:$0xff]
    %v637 = vld [vmem:[#allocation2 + $0x90] sm:$0xff]
    %v638 = vld [vmem:[#allocation2 + $0x98] sm:$0xff]
    %v639 = vld [vmem:[#allocation2 + $0xa0] sm:$0xff]
    %v640 = vld [vmem:[#allocation2 + $0xa8] sm:$0xff]
    %v641 = vld [vmem:[#allocation2 + $0xb0] sm:$0xff]
    %v642 = vld [vmem:[#allocation2 + $0xb8] sm:$0xff]
    %v643 = vld [vmem:[#allocation2 + $0xc0] sm:$0xff]
    %v644 = vld [vmem:[#allocation2 + $0xc8] sm:$0xff]
    %v645 = vld [vmem:[#allocation2 + $0xd0] sm:$0xff]
    %v646 = vld [vmem:[#allocation2 + $0xd8] sm:$0xff]
    %v647 = vld [vmem:[#allocation2 + $0xe0] sm:$0xff]
    %v648 = vld [vmem:[#allocation2 + $0xe8] sm:$0xff]
    %v649 = vld [vmem:[#allocation2 + $0xf0] sm:$0xff]
    %v650 = vld [vmem:[#allocation2 + $0xf8] sm:$0xff]
    %v651 = vld [vmem:[#allocation2 + $0x100] sm:$0xff]
    %v652 = vld [vmem:[#allocation2 + $0x108] sm:$0xff]
    %v653 = vld [vmem:[#allocation2 + $0x110] sm:$0xff]
    %v654 = vld [vmem:[#allocation2 + $0x118] sm:$0xff]
    %v655 = vld [vmem:[#allocation2 + $0x120] sm:$0xff]
    %v656 = vld [vmem:[#allocation2 + $0x128] sm:$0xff]
    %v657 = vld [vmem:[#allocation2 + $0x130] sm:$0xff]
    %v658 = vld [vmem:[#allocation2 + $0x138] sm:$0xff]
    %v659 = vld [vmem:[#allocation2 + $0x140] sm:$0xff]
    %v660 = vld [vmem:[#allocation2 + $0x148] sm:$0xff]
    %v661 = vld [vmem:[#allocation2 + $0x150] sm:$0xff]
    %v662 = vld [vmem:[#allocation2 + $0x158] sm:$0xff]
    %v663 = vld [vmem:[#allocation2 + $0x160] sm:$0xff]
    %v664 = vld [vmem:[#allocation2 + $0x168] sm:$0xff]
    %v665 = vld [vmem:[#allocation2 + $0x170] sm:$0xff]
    %v666 = vld [vmem:[#allocation2 + $0x178] sm:$0xff]
    %v667 = vld [vmem:[#allocation2 + $0x180] sm:$0xff]
    %v668 = vld [vmem:[#allocation2 + $0x188] sm:$0xff]
    %v669 = vld [vmem:[#allocation2 + $0x190] sm:$0xff]
    %v670 = vld [vmem:[#allocation2 + $0x198] sm:$0xff]
    %v671 = vld [vmem:[#allocation2 + $0x1a0] sm:$0xff]
    %v672 = vld [vmem:[#allocation2 + $0x1a8] sm:$0xff]
    %v673 = vld [vmem:[#allocation2 + $0x1b0] sm:$0xff]
    %v674 = vld [vmem:[#allocation2 + $0x1b8] sm:$0xff]
    %v675 = vld [vmem:[#allocation2 + $0x1c0] sm:$0xff]
    %v676 = vld [vmem:[#allocation2 + $0x1c8] sm:$0xff]
    %v677 = vld [vmem:[#allocation2 + $0x1d0] sm:$0xff]
    %v678 = vld [vmem:[#allocation2 + $0x1d8] sm:$0xff]
    %v679 = vld [vmem:[#allocation2 + $0x1e0] sm:$0xff]
    %v680 = vld [vmem:[#allocation2 + $0x1e8] sm:$0xff]
    %v681 = vld [vmem:[#allocation2 + $0x1f0] sm:$0xff]
    %v682 = vld [vmem:[#allocation2 + $0x1f8] sm:$0xff]
    %683 = vmatpush.msra.mxu0 %v679
    %684 = vmatpush.msra.mxu0 %v675
    %685 = vmatpush.msra.mxu0 %v671
    %686 = vmatpush.msra.mxu0 %v667
    %687 = vmatpush.msra.mxu0 %v663
    %688 = vmatpush.msra.mxu0 %v659
    %689 = vmatpush.msra.mxu0 %v655
    %690 = vmatpush.msra.mxu0 %v651
    %691 = vmatpush.msra.mxu0 %v647
    %692 = vmatpush.msra.mxu0 %v643
    %693 = vmatpush.msra.mxu0 %v639
    %694 = vmatpush.msra.mxu0 %v635
    %695 = vmatpush.msra.mxu0 %v631
    %696 = vmatpush.msra.mxu0 %v627
    %697 = vmatpush.msra.mxu0 %v623
    %698 = vmatpush.msra.mxu0 %v619
    %699 = vmatmul.f32.gmra.mxu0 %v569
    %v700 = vpop.f32.mrf.mxu0
    %v701 = vadd.f32 0.0, %v700
    %702 = vmatmul.f32.gmra.mxu0 %v584
    %v703 = vpop.f32.mrf.mxu0
    %v704 = vadd.f32 0.0, %v703
    %705 = vmatmul.f32.gmra.mxu0 %v599
    %v706 = vpop.f32.mrf.mxu0
    %v707 = vadd.f32 0.0, %v706
    %708 = vmatmul.f32.gmra.mxu0 %v614
    %v709 = vpop.f32.mrf.mxu0
    %v710 = vadd.f32 0.0, %v709
    %711 = vdwg.mxu0
    %712 = vmatpush.msra.mxu0 %v680
    %713 = vmatpush.msra.mxu0 %v676
    %714 = vmatpush.msra.mxu0 %v672
    %715 = vmatpush.msra.mxu0 %v668
    %716 = vmatpush.msra.mxu0 %v664
    %717 = vmatpush.msra.mxu0 %v660
    %718 = vmatpush.msra.mxu0 %v656
    %719 = vmatpush.msra.mxu0 %v652
    %720 = vmatpush.msra.mxu0 %v648
    %721 = vmatpush.msra.mxu0 %v644
    %722 = vmatpush.msra.mxu0 %v640
    %723 = vmatpush.msra.mxu0 %v636
    %724 = vmatpush.msra.mxu0 %v632
    %725 = vmatpush.msra.mxu0 %v628
    %726 = vmatpush.msra.mxu0 %v624
    %727 = vmatpush.msra.mxu0 %v620
    %728 = vmatmul.f32.gmra.mxu0 %v569
    %v729 = vpop.f32.mrf.mxu0
    %v730 = vadd.f32 0.0, %v729
    %731 = vmatmul.f32.gmra.mxu0 %v584
    %v732 = vpop.f32.mrf.mxu0
    %v733 = vadd.f32 0.0, %v732
    %734 = vmatmul.f32.gmra.mxu0 %v599
    %v735 = vpop.f32.mrf.mxu0
    %v736 = vadd.f32 0.0, %v735
    %737 = vmatmul.f32.gmra.mxu0 %v614
    %v738 = vpop.f32.mrf.mxu0
    %v739 = vadd.f32 0.0, %v738
    %740 = vdwg.mxu0
    %741 = vmatpush.msra.mxu0 %v681
    %742 = vmatpush.msra.mxu0 %v677
    %743 = vmatpush.msra.mxu0 %v673
    %744 = vmatpush.msra.mxu0 %v669
    %745 = vmatpush.msra.mxu0 %v665
    %746 = vmatpush.msra.mxu0 %v661
    %747 = vmatpush.msra.mxu0 %v657
    %748 = vmatpush.msra.mxu0 %v653
    %749 = vmatpush.msra.mxu0 %v649
    %750 = vmatpush.msra.mxu0 %v645
    %751 = vmatpush.msra.mxu0 %v641
    %752 = vmatpush.msra.mxu0 %v637
    %753 = vmatpush.msra.mxu0 %v633
    %754 = vmatpush.msra.mxu0 %v629
    %755 = vmatpush.msra.mxu0 %v625
    %756 = vmatpush.msra.mxu0 %v621
    %757 = vmatmul.f32.gmra.mxu0 %v569
    %v758 = vpop.f32.mrf.mxu0
    %v759 = vadd.f32 0.0, %v758
    %760 = vmatmul.f32.gmra.mxu0 %v584
    %v761 = vpop.f32.mrf.mxu0
    %v762 = vadd.f32 0.0, %v761
    %763 = vmatmul.f32.gmra.mxu0 %v599
    %v764 = vpop.f32.mrf.mxu0
    %v765 = vadd.f32 0.0, %v764
    %766 = vmatmul.f32.gmra.mxu0 %v614
    %v767 = vpop.f32.mrf.mxu0
    %v768 = vadd.f32 0.0, %v767
    %769 = vdwg.mxu0
    %770 = vmatpush.msra.mxu0 %v682
    %771 = vmatpush.msra.mxu0 %v678
    %772 = vmatpush.msra.mxu0 %v674
    %773 = vmatpush.msra.mxu0 %v670
    %774 = vmatpush.msra.mxu0 %v666
    %775 = vmatpush.msra.mxu0 %v662
    %776 = vmatpush.msra.mxu0 %v658
    %777 = vmatpush.msra.mxu0 %v654
    %778 = vmatpush.msra.mxu0 %v650
    %779 = vmatpush.msra.mxu0 %v646
    %780 = vmatpush.msra.mxu0 %v642
    %781 = vmatpush.msra.mxu0 %v638
    %782 = vmatpush.msra.mxu0 %v634
    %783 = vmatpush.msra.mxu0 %v630
    %784 = vmatpush.msra.mxu0 %v626
    %785 = vmatpush.msra.mxu0 %v622
    %786 = vmatmul.f32.gmra.mxu0 %v569
    %v787 = vpop.f32.mrf.mxu0
    %v788 = vadd.f32 0.0, %v787
    %789 = vmatmul.f32.gmra.mxu0 %v584
    %v790 = vpop.f32.mrf.mxu0
    %v791 = vadd.f32 0.0, %v790
    %792 = vmatmul.f32.gmra.mxu0 %v599
    %v793 = vpop.f32.mrf.mxu0
    %v794 = vadd.f32 0.0, %v793
    %795 = vmatmul.f32.gmra.mxu0 %v614
    %v796 = vpop.f32.mrf.mxu0
    %v797 = vadd.f32 0.0, %v796
    %798 = vdwg.mxu0
    %v799 = vmul.f32 %v269, %v701
    %v800 = vmul.f32 %v270, %v730
    %v801 = vmul.f32 %v271, %v759
    %v802 = vmul.f32 %v272, %v788
    %v803 = vmul.f32 %v273, %v704
    %v804 = vmul.f32 %v274, %v733
    %v805 = vmul.f32 %v275, %v762
    %v806 = vmul.f32 %v276, %v791
    %v807 = vmul.f32 %v277, %v707
    %v808 = vmul.f32 %v278, %v736
    %v809 = vmul.f32 %v279, %v765
    %v810 = vmul.f32 %v280, %v794
    %v811 = vmul.f32 %v281, %v710
    %v812 = vmul.f32 %v282, %v739
    %v813 = vmul.f32 %v283, %v768
    %v814 = vmul.f32 %v284, %v797
    %v815 = vpack.c.bf16 %v803, %v799
    %v816 = vpack.c.bf16 %v804, %v800
    %v817 = vpack.c.bf16 %v805, %v801
    %v818 = vpack.c.bf16 %v806, %v802
    %v819 = vpack.c.bf16 %v811, %v807
    %v820 = vpack.c.bf16 %v812, %v808
    %v821 = vpack.c.bf16 %v813, %v809
    %v822 = vpack.c.bf16 %v814, %v810
    %v823 = vld [vmem:[%s4] sm:$0xf]
    %v824 = vld [vmem:[%s4 + $0x4] sm:$0xf]
    %v825 = vld [vmem:[%s4 + $0x8] sm:$0xf]
    %v826 = vld [vmem:[%s4 + $0xc] sm:$0xf]
    %v827 = vld [vmem:[%s4 + $0x10] sm:$0xf]
    %v828 = vld [vmem:[%s4 + $0x14] sm:$0xf]
    %v829 = vld [vmem:[%s4 + $0x18] sm:$0xf]
    %v830 = vld [vmem:[%s4 + $0x1c] sm:$0xf]
    %v831 = vld [vmem:[%s4 + $0x20] sm:$0xf]
    %v832 = vld [vmem:[%s4 + $0x24] sm:$0xf]
    %v833 = vld [vmem:[%s4 + $0x28] sm:$0xf]
    %v834 = vld [vmem:[%s4 + $0x2c] sm:$0xf]
    %v835 = vld [vmem:[%s4 + $0x30] sm:$0xf]
    %v836 = vld [vmem:[%s4 + $0x34] sm:$0xf]
    %v837 = vld [vmem:[%s4 + $0x38] sm:$0xf]
    %v838 = vld [vmem:[%s4 + $0x3c] sm:$0xf]
    %v839 = vld [vmem:[%s4 + $0x40] sm:$0xf]
    %v840 = vld [vmem:[%s4 + $0x44] sm:$0xf]
    %v841 = vld [vmem:[%s4 + $0x48] sm:$0xf]
    %v842 = vld [vmem:[%s4 + $0x4c] sm:$0xf]
    %v843 = vld [vmem:[%s4 + $0x50] sm:$0xf]
    %v844 = vld [vmem:[%s4 + $0x54] sm:$0xf]
    %v845 = vld [vmem:[%s4 + $0x58] sm:$0xf]
    %v846 = vld [vmem:[%s4 + $0x5c] sm:$0xf]
    %v847 = vld [vmem:[%s4 + $0x60] sm:$0xf]
    %v848 = vld [vmem:[%s4 + $0x64] sm:$0xf]
    %v849 = vld [vmem:[%s4 + $0x68] sm:$0xf]
    %v850 = vld [vmem:[%s4 + $0x6c] sm:$0xf]
    %v851 = vld [vmem:[%s4 + $0x70] sm:$0xf]
    %v852 = vld [vmem:[%s4 + $0x74] sm:$0xf]
    %v853 = vld [vmem:[%s4 + $0x78] sm:$0xf]
    %v854 = vld [vmem:[%s4 + $0x7c] sm:$0xf]
    %v855 = vld [vmem:[%s4 + $0x80] sm:$0xf]
    %v856 = vld [vmem:[%s4 + $0x84] sm:$0xf]
    %v857 = vld [vmem:[%s4 + $0x88] sm:$0xf]
    %v858 = vld [vmem:[%s4 + $0x8c] sm:$0xf]
    %v859 = vld [vmem:[%s4 + $0x90] sm:$0xf]
    %v860 = vld [vmem:[%s4 + $0x94] sm:$0xf]
    %v861 = vld [vmem:[%s4 + $0x98] sm:$0xf]
    %v862 = vld [vmem:[%s4 + $0x9c] sm:$0xf]
    %v863 = vld [vmem:[%s4 + $0xa0] sm:$0xf]
    %v864 = vld [vmem:[%s4 + $0xa4] sm:$0xf]
    %v865 = vld [vmem:[%s4 + $0xa8] sm:$0xf]
    %v866 = vld [vmem:[%s4 + $0xac] sm:$0xf]
    %v867 = vld [vmem:[%s4 + $0xb0] sm:$0xf]
    %v868 = vld [vmem:[%s4 + $0xb4] sm:$0xf]
    %v869 = vld [vmem:[%s4 + $0xb8] sm:$0xf]
    %v870 = vld [vmem:[%s4 + $0xbc] sm:$0xf]
    %v871 = vld [vmem:[%s4 + $0xc0] sm:$0xf]
    %v872 = vld [vmem:[%s4 + $0xc4] sm:$0xf]
    %v873 = vld [vmem:[%s4 + $0xc8] sm:$0xf]
    %v874 = vld [vmem:[%s4 + $0xcc] sm:$0xf]
    %v875 = vld [vmem:[%s4 + $0xd0] sm:$0xf]
    %v876 = vld [vmem:[%s4 + $0xd4] sm:$0xf]
    %v877 = vld [vmem:[%s4 + $0xd8] sm:$0xf]
    %v878 = vld [vmem:[%s4 + $0xdc] sm:$0xf]
    %v879 = vld [vmem:[%s4 + $0xe0] sm:$0xf]
    %v880 = vld [vmem:[%s4 + $0xe4] sm:$0xf]
    %v881 = vld [vmem:[%s4 + $0xe8] sm:$0xf]
    %v882 = vld [vmem:[%s4 + $0xec] sm:$0xf]
    %v883 = vld [vmem:[%s4 + $0xf0] sm:$0xf]
    %v884 = vld [vmem:[%s4 + $0xf4] sm:$0xf]
    %v885 = vld [vmem:[%s4 + $0xf8] sm:$0xf]
    %v886 = vld [vmem:[%s4 + $0xfc] sm:$0xf]
    %v887 = vld [vmem:[%s5] sm:$0xff]
    %v888 = vld [vmem:[%s5 + $0x8] sm:$0xff]
    %v889 = vld [vmem:[%s5 + $0x10] sm:$0xff]
    %v890 = vld [vmem:[%s5 + $0x18] sm:$0xff]
    %v891 = vld [vmem:[%s5 + $0x20] sm:$0xff]
    %v892 = vld [vmem:[%s5 + $0x28] sm:$0xff]
    %v893 = vld [vmem:[%s5 + $0x30] sm:$0xff]
    %v894 = vld [vmem:[%s5 + $0x38] sm:$0xff]
    %v895 = vld [vmem:[%s5 + $0x40] sm:$0xff]
    %v896 = vld [vmem:[%s5 + $0x48] sm:$0xff]
    %v897 = vld [vmem:[%s5 + $0x50] sm:$0xff]
    %v898 = vld [vmem:[%s5 + $0x58] sm:$0xff]
    %v899 = vld [vmem:[%s5 + $0x60] sm:$0xff]
    %v900 = vld [vmem:[%s5 + $0x68] sm:$0xff]
    %v901 = vld [vmem:[%s5 + $0x70] sm:$0xff]
    %v902 = vld [vmem:[%s5 + $0x78] sm:$0xff]
    %903 = vmatpush.msra.mxu0 %v902
    %904 = vmatpush.msra.mxu0 %v901
    %905 = vmatpush.msra.mxu0 %v900
    %906 = vmatpush.msra.mxu0 %v899
    %907 = vmatpush.msra.mxu0 %v898
    %908 = vmatpush.msra.mxu0 %v897
    %909 = vmatpush.msra.mxu0 %v896
    %910 = vmatpush.msra.mxu0 %v895
    %911 = vmatpush.msra.mxu0 %v894
    %912 = vmatpush.msra.mxu0 %v893
    %913 = vmatpush.msra.mxu0 %v892
    %914 = vmatpush.msra.mxu0 %v891
    %915 = vmatpush.msra.mxu0 %v890
    %916 = vmatpush.msra.mxu0 %v889
    %917 = vmatpush.msra.mxu0 %v888
    %918 = vmatpush.msra.mxu0 %v887
    %919 = vmatmul.f32.gmra.mxu0 %v569
    %v920 = vpop.f32.mrf.mxu0
    %v921 = vadd.f32 0.0, %v920
    %922 = vmatmul.f32.gmra.mxu0 %v584
    %v923 = vpop.f32.mrf.mxu0
    %v924 = vadd.f32 0.0, %v923
    %925 = vmatmul.f32.gmra.mxu0 %v599
    %v926 = vpop.f32.mrf.mxu0
    %v927 = vadd.f32 0.0, %v926
    %928 = vmatmul.f32.gmra.mxu0 %v614
    %v929 = vpop.f32.mrf.mxu0
    %v930 = vadd.f32 0.0, %v929
    %931 = vdwg.mxu0
    %v996 = vunpack.c.l.b16 %v823
    %v997 = vunpack.c.l.b16 %v824
    %v998 = vunpack.c.l.b16 %v825
    %v999 = vunpack.c.l.b16 %v826
    %v1000 = vunpack.c.l.b16 %v827
    %v1001 = vunpack.c.l.b16 %v828
    %v1002 = vunpack.c.l.b16 %v829
    %v1003 = vunpack.c.l.b16 %v830
    %v1004 = vunpack.c.l.b16 %v831
    %v1005 = vunpack.c.l.b16 %v832
    %v1006 = vunpack.c.l.b16 %v833
    %v1007 = vunpack.c.l.b16 %v834
    %v1008 = vunpack.c.l.b16 %v835
    %v1009 = vunpack.c.l.b16 %v836
    %v1010 = vunpack.c.l.b16 %v837
    %v1011 = vunpack.c.l.b16 %v838
    %v1012 = vunpack.c.l.b16 %v839
    %v1013 = vunpack.c.l.b16 %v840
    %v1014 = vunpack.c.l.b16 %v841
    %v1015 = vunpack.c.l.b16 %v842
    %v1016 = vunpack.c.l.b16 %v843
    %v1017 = vunpack.c.l.b16 %v844
    %v1018 = vunpack.c.l.b16 %v845
    %v1019 = vunpack.c.l.b16 %v846
    %v1020 = vunpack.c.l.b16 %v847
    %v1021 = vunpack.c.l.b16 %v848
    %v1022 = vunpack.c.l.b16 %v849
    %v1023 = vunpack.c.l.b16 %v850
    %v1024 = vunpack.c.l.b16 %v851
    %v1025 = vunpack.c.l.b16 %v852
    %v1026 = vunpack.c.l.b16 %v853
    %v1027 = vunpack.c.l.b16 %v854
    %v1028 = vunpack.c.l.b16 %v855
    %v1029 = vunpack.c.l.b16 %v856
    %v1030 = vunpack.c.l.b16 %v857
    %v1031 = vunpack.c.l.b16 %v858
    %v1032 = vunpack.c.l.b16 %v859
    %v1033 = vunpack.c.l.b16 %v860
    %v1034 = vunpack.c.l.b16 %v861
    %v1035 = vunpack.c.l.b16 %v862
    %v1036 = vunpack.c.l.b16 %v863
    %v1037 = vunpack.c.l.b16 %v864
    %v1038 = vunpack.c.l.b16 %v865
    %v1039 = vunpack.c.l.b16 %v866
    %v1040 = vunpack.c.l.b16 %v867
    %v1041 = vunpack.c.l.b16 %v868
    %v1042 = vunpack.c.l.b16 %v869
    %v1043 = vunpack.c.l.b16 %v870
    %v1044 = vunpack.c.l.b16 %v871
    %v1045 = vunpack.c.l.b16 %v872
    %v1046 = vunpack.c.l.b16 %v873
    %v1047 = vunpack.c.l.b16 %v874
    %v1048 = vunpack.c.l.b16 %v875
    %v1049 = vunpack.c.l.b16 %v876
    %v1050 = vunpack.c.l.b16 %v877
    %v1051 = vunpack.c.l.b16 %v878
    %v1052 = vunpack.c.l.b16 %v879
    %v1053 = vunpack.c.l.b16 %v880
    %v1054 = vunpack.c.l.b16 %v881
    %v1055 = vunpack.c.l.b16 %v882
    %v1056 = vunpack.c.l.b16 %v883
    %v1057 = vunpack.c.l.b16 %v884
    %v1058 = vunpack.c.l.b16 %v885
    %v1059 = vunpack.c.l.b16 %v886
    %v1060 = vpack.c.b16 %v997, %v996
    %v1061 = vpack.c.b16 %v999, %v998
    %v1062 = vpack.c.b16 %v1001, %v1000
    %v1063 = vpack.c.b16 %v1003, %v1002
    %v1064 = vpack.c.b16 %v1005, %v1004
    %v1065 = vpack.c.b16 %v1007, %v1006
    %v1066 = vpack.c.b16 %v1009, %v1008
    %v1067 = vpack.c.b16 %v1011, %v1010
    %v1068 = vpack.c.b16 %v1013, %v1012
    %v1069 = vpack.c.b16 %v1015, %v1014
    %v1070 = vpack.c.b16 %v1017, %v1016
    %v1071 = vpack.c.b16 %v1019, %v1018
    %v1072 = vpack.c.b16 %v1021, %v1020
    %v1073 = vpack.c.b16 %v1023, %v1022
    %v1074 = vpack.c.b16 %v1025, %v1024
    %v1075 = vpack.c.b16 %v1027, %v1026
    %v1076 = vpack.c.b16 %v1029, %v1028
    %v1077 = vpack.c.b16 %v1031, %v1030
    %v1078 = vpack.c.b16 %v1033, %v1032
    %v1079 = vpack.c.b16 %v1035, %v1034
    %v1080 = vpack.c.b16 %v1037, %v1036
    %v1081 = vpack.c.b16 %v1039, %v1038
    %v1082 = vpack.c.b16 %v1041, %v1040
    %v1083 = vpack.c.b16 %v1043, %v1042
    %v1084 = vpack.c.b16 %v1045, %v1044
    %v1085 = vpack.c.b16 %v1047, %v1046
    %v1086 = vpack.c.b16 %v1049, %v1048
    %v1087 = vpack.c.b16 %v1051, %v1050
    %v1088 = vpack.c.b16 %v1053, %v1052
    %v1089 = vpack.c.b16 %v1055, %v1054
    %v1090 = vpack.c.b16 %v1057, %v1056
    %v1091 = vpack.c.b16 %v1059, %v1058
    %1124 = vmatpush.bf16.msra.mxu0 %v1067
    %1125 = vmatpush.bf16.msra.mxu0 %v1066
    %1126 = vmatpush.bf16.msra.mxu0 %v1065
    %1127 = vmatpush.bf16.msra.mxu0 %v1064
    %1128 = vmatpush.bf16.msra.mxu0 %v1063
    %1129 = vmatpush.bf16.msra.mxu0 %v1062
    %1130 = vmatpush.bf16.msra.mxu0 %v1061
    %1131 = vmatpush.bf16.msra.mxu0 %v1060
    %1132 = vmatmul.bf16.gmra.mxu0 %v815
    %v1133 = vpop.f32.mrf.mxu0
    %v1134 = vadd.f32 %v921, %v1133
    %v1135 = vpop.f32.mrf.mxu0
    %v1136 = vadd.f32 %v924, %v1135
    %1137 = vmatmul.bf16.gmra.mxu0 %v819
    %v1138 = vpop.f32.mrf.mxu0
    %v1139 = vadd.f32 %v927, %v1138
    %v1140 = vpop.f32.mrf.mxu0
    %v1141 = vadd.f32 %v930, %v1140
    %1142 = vdwg.mxu0
    %1143 = vmatpush.bf16.msra.mxu0 %v1075
    %1144 = vmatpush.bf16.msra.mxu0 %v1074
    %1145 = vmatpush.bf16.msra.mxu0 %v1073
    %1146 = vmatpush.bf16.msra.mxu0 %v1072
    %1147 = vmatpush.bf16.msra.mxu0 %v1071
    %1148 = vmatpush.bf16.msra.mxu0 %v1070
    %1149 = vmatpush.bf16.msra.mxu0 %v1069
    %1150 = vmatpush.bf16.msra.mxu0 %v1068
    %1151 = vmatmul.bf16.gmra.mxu0 %v816
    %v1152 = vpop.f32.mrf.mxu0
    %v1153 = vadd.f32 %v1134, %v1152
    %v1154 = vpop.f32.mrf.mxu0
    %v1155 = vadd.f32 %v1136, %v1154
    %1156 = vmatmul.bf16.gmra.mxu0 %v820
    %v1157 = vpop.f32.mrf.mxu0
    %v1158 = vadd.f32 %v1139, %v1157
    %v1159 = vpop.f32.mrf.mxu0
    %v1160 = vadd.f32 %v1141, %v1159
    %1161 = vdwg.mxu0
    %1162 = vmatpush.bf16.msra.mxu0 %v1083
    %1163 = vmatpush.bf16.msra.mxu0 %v1082
    %1164 = vmatpush.bf16.msra.mxu0 %v1081
    %1165 = vmatpush.bf16.msra.mxu0 %v1080
    %1166 = vmatpush.bf16.msra.mxu0 %v1079
    %1167 = vmatpush.bf16.msra.mxu0 %v1078
    %1168 = vmatpush.bf16.msra.mxu0 %v1077
    %1169 = vmatpush.bf16.msra.mxu0 %v1076
    %1170 = vmatmul.bf16.gmra.mxu0 %v817
    %v1171 = vpop.f32.mrf.mxu0
    %v1172 = vadd.f32 %v1153, %v1171
    %v1173 = vpop.f32.mrf.mxu0
    %v1174 = vadd.f32 %v1155, %v1173
    %1175 = vmatmul.bf16.gmra.mxu0 %v821
    %v1176 = vpop.f32.mrf.mxu0
    %v1177 = vadd.f32 %v1158, %v1176
    %v1178 = vpop.f32.mrf.mxu0
    %v1179 = vadd.f32 %v1160, %v1178
    %1180 = vdwg.mxu0
    %1181 = vmatpush.bf16.msra.mxu0 %v1091
    %1182 = vmatpush.bf16.msra.mxu0 %v1090
    %1183 = vmatpush.bf16.msra.mxu0 %v1089
    %1184 = vmatpush.bf16.msra.mxu0 %v1088
    %1185 = vmatpush.bf16.msra.mxu0 %v1087
    %1186 = vmatpush.bf16.msra.mxu0 %v1086
    %1187 = vmatpush.bf16.msra.mxu0 %v1085
    %1188 = vmatpush.bf16.msra.mxu0 %v1084
    %1189 = vmatmul.bf16.gmra.mxu0 %v818
    %v1190 = vpop.f32.mrf.mxu0
    %v1191 = vadd.f32 %v1172, %v1190
    %v1192 = vpop.f32.mrf.mxu0
    %v1193 = vadd.f32 %v1174, %v1192
    %1194 = vmatmul.bf16.gmra.mxu0 %v822
    %v1195 = vpop.f32.mrf.mxu0
    %v1196 = vadd.f32 %v1177, %v1195
    %v1197 = vpop.f32.mrf.mxu0
    %v1198 = vadd.f32 %v1179, %v1197
    %1199 = vdwg.mxu0
    %v1200 = vpack.c.bf16 %v1191, %v1191
    %v1201 = vpack.c.bf16 %v1193, %v1193
    %v1202 = vpack.c.bf16 %v1196, %v1196
    %v1203 = vpack.c.bf16 %v1198, %v1198
    %vm1204 = vcmask 257024
    %1205 = vst.msk [vmem:[#allocation5] sm:$0xf] %vm1204, %v1200
    %1206 = vst.msk [vmem:[#allocation5 + $0x4] sm:$0xf] %vm1204, %v1201
    %1207 = vst.msk [vmem:[#allocation5 + $0x8] sm:$0xf] %vm1204, %v1202
    %1208 = vst.msk [vmem:[#allocation5 + $0xc] sm:$0xf] %vm1204, %v1203
    // Predicated region
    $region34: #{tpu_custom_call.1} parent=1 // pred_check
      _
    $region35: #{tpu_custom_call.1} parent=1 // pred_check_branch
      %1210 = sbr.rel (0) target = $region37
    $region36: #{tpu_custom_call.1} parent=1 // pred_region
      %1212 = vsyncadd [#allocation4], 0
      %s1213 = sshll.u32 [#allocation5], 4
      %s1214 = int_to_ptr.vmem [resolvable:$true] %s1213
      %s1215 = sshll.u32 %s7, 4
      %s1216 = int_to_ptr.hbm [resolvable:$true] %s1215
      %1221 = dma.vmem_to_hbm [thread:$0]  %s1214, 256, %s1216, [#allocation4], 64, 64, 4
    $region37: #{tpu_custom_call.1} parent=1 // pred_fallthru
      _
    // Predicated region
    $region38: #{tpu_custom_call.1} parent=1 // pred_check
      _
    $region39: #{tpu_custom_call.1} parent=1 // pred_check_branch
      %1223 = sbr.rel (0) target = $region41
    $region40: #{tpu_custom_call.1} parent=1 // pred_region
      %1225 = vsyncadd [#allocation7], 0
      %s1226 = sshll.u32 [#allocation6], 4
      %s1227 = int_to_ptr.vmem [resolvable:$true] %s1226
      %s1228 = sshll.u32 %s8, 4
      %s1229 = int_to_ptr.hbm [resolvable:$true] %s1228
      %1234 = dma.vmem_to_hbm [thread:$0]  %s1227, 512, %s1229, [#allocation7], 128, 128, 8
    $region41: #{tpu_custom_call.1} parent=1 // pred_fallthru
      _
    // Predicated region
    $region42: #{tpu_custom_call.1} parent=1 // pred_check
      _
    $region43: #{tpu_custom_call.1} parent=1 // pred_check_branch
      %1236 = sbr.rel (0) target = $region45
    $region44: #{tpu_custom_call.1} parent=1 // pred_region
      %1238 = vsyncadd [#allocation7], 0
      %s1240 = sshll.u32 [#allocation8], 4
      %s1241 = int_to_ptr.vmem [resolvable:$true] %s1240
      %s1242 = sshll.u32 %s9, 4
      %s1243 = int_to_ptr.hbm [resolvable:$true] %s1242
      %1245 = dma.vmem_to_hbm [thread:$0]  %s1241, 128, %s1243, [#allocation7]
    $region45: #{tpu_custom_call.1} parent=1 // pred_fallthru
      _
    // Predicated region
    $region46: #{tpu_custom_call.1} parent=1 // pred_check
      _
    $region47: #{tpu_custom_call.1} parent=1 // pred_check_branch
      %1247 = sbr.rel (0) target = $region49
    $region48: #{tpu_custom_call.1} parent=1 // pred_region
      %1249 = dma.done [#allocation4], 256
    $region49: #{tpu_custom_call.1} parent=1 // pred_fallthru
      _
    // Predicated region
    $region50: #{tpu_custom_call.1} parent=1 // pred_check
      _
    $region51: #{tpu_custom_call.1} parent=1 // pred_check_branch
      %1251 = sbr.rel (0) target = $region53
    $region52: #{tpu_custom_call.1} parent=1 // pred_region
      %1253 = dma.done [#allocation7], 512
    $region53: #{tpu_custom_call.1} parent=1 // pred_fallthru
      _
    // Predicated region
    $region54: #{tpu_custom_call.1} parent=1 // pred_check
      _
    $region55: #{tpu_custom_call.1} parent=1 // pred_check_branch
      %1255 = sbr.rel (0) target = $region57
    $region56: #{tpu_custom_call.1} parent=1 // pred_region
      %1257 = dma.done [#allocation7], 128
    $region57: #{tpu_custom_call.1} parent=1 // pred_fallthru
      _
    %1258 = vsyncpa [#allocation3], 1
    %1259 = vsyncpa [#allocation4], 1
    %1260 = vsyncpa [#allocation7], 1

</llo_original>
